<compile_context>
chip_gen: v5e
topology: v5e:2x2
jax: 0.10.0
libtpu: 0.0.40
codegen_flags: <defaults>
</compile_context>

<pallas_src>
import math

import jax
import jax.numpy as jnp
from jax.experimental import pallas as pl
from jax.experimental.pallas import tpu as pltpu


# ----------------------------------------------------------------------------
# Kernel: runs one LSTM step per grid iteration, state carried in VMEM scratch.
# ----------------------------------------------------------------------------
def _lstm_seq_kernel(xs_ref, h0_ref, c0_ref, w_ref, u_ref, b_ref,
                     out_ref, h_sc, c_sc):
    # xs_ref: (1, in)   -- this step's input row (streams with t)
    # h0/c0 : (1, H)    -- initial state (VMEM resident)
    # w_ref : (in, 4H)  -- stacked [wf | wi | wo | wc] (VMEM resident)
    # u_ref : (H, 4H)   -- per-gate u_g broadcast across the gate's H lanes
    # b_ref : (1, 4H)   -- stacked biases
    # out_ref: (2, H)   -- row 0 = h_T, row 1 = c_T (stored only at t == T-1)
    t = pl.program_id(0)
    H = h0_ref.shape[-1]

    @pl.when(t == 0)
    def _init():
        h_sc[...] = h0_ref[...]
        c_sc[...] = c0_ref[...]

    h = h_sc[...]
    c = c_sc[...]
    mdt = w_ref.dtype  # matmul operand dtype (f32, or bf16 on v6e/v7x)

    # All four gate pre-activations in one full-vreg row: (1, 4H).
    # dot(h, u_g) (scalar per gate, broadcast over that gate) is reproduced by
    # h @ U with U's gate-g block = u_g broadcast across all H output lanes.
    z = (jnp.dot(xs_ref[...].astype(mdt), w_ref[...],
                 preferred_element_type=jnp.float32)
         + jnp.dot(h.astype(mdt), u_ref[...],
                   preferred_element_type=jnp.float32)
         + b_ref[...])

    # sigmoid on the [f|i|o] lanes, tanh on the [c'] lanes with one full-row
    # mask (keeps EUP/VPU work full-vreg; no sub-lane slicing of z).
    lane = jax.lax.broadcasted_iota(jnp.int32, z.shape, 1)
    a = jnp.where(lane < 3 * H, jax.nn.sigmoid(z), jnp.tanh(z))

    # Gate recombination.  For production sizes (H a multiple of 128) these
    # slices are vreg-aligned (free); at toy H they are cheap lane selects.
    ft = a[:, 0 * H:1 * H]
    it = a[:, 1 * H:2 * H]
    ot = a[:, 2 * H:3 * H]
    cp = a[:, 3 * H:4 * H]

    c_new = ft * c + it * cp
    h_new = ot * jnp.tanh(c_new)

    h_sc[...] = h_new
    c_sc[...] = c_new

    # Store only at sequence end, into a single (2, H) slab.
    @pl.when(t == pl.num_programs(0) - 1)
    def _store():
        out_ref[0:1, :] = h_new
        out_ref[1:2, :] = c_new


# ----------------------------------------------------------------------------
# One-time parameter packing (hoisted out of the hot path).
# ----------------------------------------------------------------------------
def pack_params(params, matmul_dtype=jnp.float32):
    """Pack module parameters once.  matmul_dtype=jnp.bfloat16 halves weight
    traffic on v6e/v7x; keep f32 on v5e / when bit-tight accuracy is needed."""
    H = params["uf"].shape[0]
    w = jnp.concatenate([params["wf"], params["wi"],
                         params["wo"], params["wc"]], axis=1)            # (in, 4H)
    b = jnp.concatenate([params["bf"], params["bi"],
                         params["bo"], params["bc"]])[None, :]            # (1, 4H)
    # 1-D u_g -> scalar dot(h, u_g) broadcast over the gate; encode as a
    # (H, 4H) matrix whose gate-g block repeats u_g across all H output lanes.
    u = jnp.concatenate(
        [jnp.broadcast_to(params[k][:, None], (H, H))
         for k in ("uf", "ui", "uo", "uc")], axis=1)                      # (H, 4H)
    return {
        "w": w.astype(matmul_dtype),
        "u": u.astype(matmul_dtype),
        "b": b.astype(jnp.float32),
    }


# ----------------------------------------------------------------------------
# Wrappers.
# ----------------------------------------------------------------------------
def _lstm_sequence_impl(xs, h0, c0, packed):
    """xs: (T, in); h0, c0: (H,). Runs T fused LSTM steps in ONE pallas_call.
    Returns (h_T, c_T)."""
    T, in_f = xs.shape
    H = h0.shape[0]
    w, u, b = packed["w"], packed["u"], packed["b"]

    xs3 = xs.reshape(T, 1, in_f).astype(jnp.float32)
    h02 = h0.reshape(1, H).astype(jnp.float32)
    c02 = c0.reshape(1, H).astype(jnp.float32)

    grid_spec = pltpu.PrefetchScalarGridSpec(
        num_scalar_prefetch=0,
        grid=(T,),
        in_specs=[
            # x_t streams with the timestep; everything else stays VMEM
            # resident (constant index_map -> no re-DMA per step).
            pl.BlockSpec((None, 1, in_f), lambda t: (t, 0, 0)),
            pl.BlockSpec((1, H), lambda t: (0, 0)),
            pl.BlockSpec((1, H), lambda t: (0, 0)),
            pl.BlockSpec(w.shape, lambda t: (0, 0)),
            pl.BlockSpec(u.shape, lambda t: (0, 0)),
            pl.BlockSpec(b.shape, lambda t: (0, 0)),
        ],
        out_specs=pl.BlockSpec((2, H), lambda t: (0, 0)),
        scratch_shapes=[pltpu.VMEM((1, H), jnp.float32),   # h carry
                        pltpu.VMEM((1, H), jnp.float32)],  # c carry
    )
    out = pl.pallas_call(
        _lstm_seq_kernel,
        out_shape=jax.ShapeDtypeStruct((2, H), jnp.float32),
        grid_spec=grid_spec,
        compiler_params=pltpu.CompilerParams(
            # Timestep axis is a serial recurrence -> "arbitrary".
            # TODO(synk): when batching independent sequences, add a leading
            # "parallel" grid axis so v7x can shard across its 2 TensorCores.
            dimension_semantics=("arbitrary",)),
    )(xs3, h02, c02, w, u, b)
    return out[0], out[1]


lstm_sequence = jax.jit(_lstm_sequence_impl)


def lstm_cell(xt, ht_prev, ct_prev, packed):
    """Single module forward step (T=1 case of the fused kernel)."""
    return lstm_sequence(xt[None, :], ht_prev, ct_prev, packed)


# ----------------------------------------------------------------------------
# Pure-JAX reference (transliteration of the PyTorch forward) + init.
# ----------------------------------------------------------------------------
def lstm_cell_reference(xt, ht_prev, ct_prev, p):
    ft = jax.nn.sigmoid(xt @ p["wf"] + jnp.dot(ht_prev, p["uf"]) + p["bf"])
    it = jax.nn.sigmoid(xt @ p["wi"] + jnp.dot(ht_prev, p["ui"]) + p["bi"])
    ot = jax.nn.sigmoid(xt @ p["wo"] + jnp.dot(ht_prev, p["uo"]) + p["bo"])
    cp = jnp.tanh(xt @ p["wc"] + jnp.dot(ht_prev, p["uc"]) + p["bc"])
    ct = ft * ct_prev + it * cp
    ht = ot * jnp.tanh(ct)
    return ht, ct


def init_params(key, in_features, out_features):
    k = 1.0 / math.sqrt(out_features)
    names_2d = ["wf", "wi", "wo", "wc"]
    names_1d = ["uf", "ui", "uo", "uc"]
    keys = jax.random.split(key, len(names_2d) + len(names_1d))
    params = {}
    for name, kk in zip(names_2d, keys[:4]):
        params[name] = jax.random.uniform(
            kk, (in_features, out_features), jnp.float32, -k, k)
    for name, kk in zip(names_1d, keys[4:]):
        params[name] = jax.random.uniform(
            kk, (out_features,), jnp.float32, -k, k)
    for name in ["bf", "bi", "bo", "bc"]:
        params[name] = jnp.zeros((out_features,), jnp.float32)
    return params


if __name__ == "__main__":
    in_features, hidden, T = 16, 32, 8

    key = jax.random.PRNGKey(0)
    kp, kx, kh, kc = jax.random.split(key, 4)
    params = init_params(kp, in_features, hidden)
    packed = pack_params(params)                    # packed once, not per step

    xs = jax.random.normal(kx, (T, in_features), jnp.float32)
    h0 = jax.random.normal(kh, (hidden,), jnp.float32)
    c0 = jax.random.normal(kc, (hidden,), jnp.float32)

    # --- single-step forward (module semantics) -----------------------------
    ht, ct = lstm_cell(xs[0], h0, c0, packed)
    jax.block_until_ready((ht, ct))
    ht_r, ct_r = lstm_cell_reference(xs[0], h0, c0, params)
    assert jnp.allclose(ht, ht_r, atol=1e-4, rtol=1e-4)
    assert jnp.allclose(ct, ct_r, atol=1e-4, rtol=1e-4)

    # --- fused T-step recurrence in one pallas_call --------------------------
    hT, cT = lstm_sequence(xs, h0, c0, packed)
    jax.block_until_ready((hT, cT))
    h_r, c_r = h0, c0
    for t in range(T):
        h_r, c_r = lstm_cell_reference(xs[t], h_r, c_r, params)
    assert jnp.allclose(hT, h_r, atol=1e-4, rtol=1e-4)
    assert jnp.allclose(cT, c_r, atol=1e-4, rtol=1e-4)

    # --- bf16-packed weights (v6e/v7x path), loose numeric sanity check ------
    packed_bf16 = pack_params(params, matmul_dtype=jnp.bfloat16)
    hT_b, cT_b = lstm_sequence(xs, h0, c0, packed_bf16)
    jax.block_until_ready((hT_b, cT_b))
    assert jnp.allclose(hT_b, h_r, atol=5e-2, rtol=5e-2)
    assert jnp.allclose(cT_b, c_r, atol=5e-2, rtol=5e-2)

    print("KERNEL_OK")
</pallas_src>

<mosaic_0001>
module attributes {stable_mosaic.version = 11 : i64} {
  func.func @_lstm_seq_kernel(%arg0: i32, %arg1: memref<1x1x16xf32, #tpu.memory_space<vmem>>, %arg2: memref<1x32xf32, #tpu.memory_space<vmem>>, %arg3: memref<1x32xf32, #tpu.memory_space<vmem>>, %arg4: memref<16x128xf32, #tpu.memory_space<vmem>>, %arg5: memref<32x128xf32, #tpu.memory_space<vmem>>, %arg6: memref<1x128xf32, #tpu.memory_space<vmem>>, %arg7: memref<2x32xf32, #tpu.memory_space<vmem>>, %arg8: memref<1x32xf32, #tpu.memory_space<vmem>>, %arg9: memref<1x32xf32, #tpu.memory_space<vmem>>) attributes {dimension_semantics = [#tpu.dimension_semantics<arbitrary>], iteration_bounds = array<i64: 1>, scalar_prefetch = 0 : i64, scratch_operands = 2 : i64, tpu.core_type = #tpu.core_type<tc>, window_params = [{transform_indices = @transform_0, window_bounds = array<i64: 1, 1, 16>}, {pipeline_mode = #tpu.pipeline_mode<synchronous>, transform_indices = @transform_1, window_bounds = array<i64: 1, 32>}, {pipeline_mode = #tpu.pipeline_mode<synchronous>, transform_indices = @transform_2, window_bounds = array<i64: 1, 32>}, {pipeline_mode = #tpu.pipeline_mode<synchronous>, transform_indices = @transform_3, window_bounds = array<i64: 16, 128>}, {pipeline_mode = #tpu.pipeline_mode<synchronous>, transform_indices = @transform_4, window_bounds = array<i64: 32, 128>}, {pipeline_mode = #tpu.pipeline_mode<synchronous>, transform_indices = @transform_5, window_bounds = array<i64: 1, 128>}, {pipeline_mode = #tpu.pipeline_mode<synchronous>, transform_indices = @transform_6, window_bounds = array<i64: 2, 32>}]} {
    %c0_i32 = arith.constant 0 : i32
    %0 = arith.cmpi eq, %arg0, %c0_i32 : i32
    %1 = arith.extui %0 : i1 to i32
    %c0_i32_0 = arith.constant 0 : i32
    %2 = arith.cmpi ne, %1, %c0_i32_0 : i32
    scf.if %2 {
      %c0_21 = arith.constant 0 : index
      %c0_22 = arith.constant 0 : index
      %38 = vector.load %arg2[%c0_21, %c0_22] : memref<1x32xf32, #tpu.memory_space<vmem>>, vector<1x32xf32>
      %c0_23 = arith.constant 0 : index
      %c0_24 = arith.constant 0 : index
      %39 = vector.load %arg8[%c0_23, %c0_24] : memref<1x32xf32, #tpu.memory_space<vmem>>, vector<1x32xf32>
      tpu.vector_store %arg8[%c0_23, %c0_24], %38 {strides = array<i32>} : memref<1x32xf32, #tpu.memory_space<vmem>>, vector<1x32xf32>,
      %c0_25 = arith.constant 0 : index
      %c0_26 = arith.constant 0 : index
      %40 = vector.load %arg3[%c0_25, %c0_26] : memref<1x32xf32, #tpu.memory_space<vmem>>, vector<1x32xf32>
      %c0_27 = arith.constant 0 : index
      %c0_28 = arith.constant 0 : index
      %41 = vector.load %arg9[%c0_27, %c0_28] : memref<1x32xf32, #tpu.memory_space<vmem>>, vector<1x32xf32>
      tpu.vector_store %arg9[%c0_27, %c0_28], %40 {strides = array<i32>} : memref<1x32xf32, #tpu.memory_space<vmem>>, vector<1x32xf32>,
    } else {
    }
    %c0 = arith.constant 0 : index
    %c0_1 = arith.constant 0 : index
    %3 = vector.load %arg8[%c0, %c0_1] : memref<1x32xf32, #tpu.memory_space<vmem>>, vector<1x32xf32>
    %c0_2 = arith.constant 0 : index
    %c0_3 = arith.constant 0 : index
    %4 = vector.load %arg9[%c0_2, %c0_3] : memref<1x32xf32, #tpu.memory_space<vmem>>, vector<1x32xf32>
    %c0_4 = arith.constant 0 : index
    %c0_5 = arith.constant 0 : index
    %c0_6 = arith.constant 0 : index
    %5 = vector.load %arg1[%c0_4, %c0_5, %c0_6] : memref<1x1x16xf32, #tpu.memory_space<vmem>>, vector<1x1x16xf32>
    %6 = vector.shape_cast %5 : vector<1x1x16xf32> to vector<1x16xf32>
    %c0_7 = arith.constant 0 : index
    %c0_8 = arith.constant 0 : index
    %7 = vector.load %arg4[%c0_7, %c0_8] : memref<16x128xf32, #tpu.memory_space<vmem>>, vector<16x128xf32>
    %cst = arith.constant dense<0.000000e+00> : vector<1x128xf32>
    %8 = tpu.matmul %6, %7, %cst {dimension_numbers = #tpu.dot_dimension_numbers<[1], [0], [0], [1], [0, 0, 1, 1], [], []>} : vector<1x16xf32>, vector<16x128xf32>, vector<1x128xf32> -> vector<1x128xf32>
    %c0_9 = arith.constant 0 : index
    %c0_10 = arith.constant 0 : index
    %9 = vector.load %arg5[%c0_9, %c0_10] : memref<32x128xf32, #tpu.memory_space<vmem>>, vector<32x128xf32>
    %cst_11 = arith.constant dense<0.000000e+00> : vector<1x128xf32>
    %10 = tpu.matmul %3, %9, %cst_11 {dimension_numbers = #tpu.dot_dimension_numbers<[1], [0], [0], [1], [0, 0, 1, 1], [], []>} : vector<1x32xf32>, vector<32x128xf32>, vector<1x128xf32> -> vector<1x128xf32>
    %11 = arith.addf %8, %10 : vector<1x128xf32>
    %c0_12 = arith.constant 0 : index
    %c0_13 = arith.constant 0 : index
    %12 = vector.load %arg6[%c0_12, %c0_13] : memref<1x128xf32, #tpu.memory_space<vmem>>, vector<1x128xf32>
    %13 = arith.addf %11, %12 : vector<1x128xf32>
    %14 = tpu.iota {dimensions = array<i32: 1>} : vector<1x128xi32>
    %c96_i32 = arith.constant 96 : i32
    %15 = vector.broadcast %c96_i32 : i32 to vector<1x128xi32>
    %16 = arith.cmpi slt, %14, %15 : vector<1x128xi32>
    %17 = arith.negf %13 : vector<1x128xf32>
    %18 = math.exp %17 : vector<1x128xf32>
    %cst_14 = arith.constant 1.000000e+00 : f32
    %19 = vector.broadcast %cst_14 : f32 to vector<1x128xf32>
    %20 = arith.addf %19, %18 : vector<1x128xf32>
    %21 = arith.divf %19, %20 : vector<1x128xf32>
    %22 = math.tanh %13 : vector<1x128xf32>
    %23 = arith.select %16, %21, %22 : vector<1x128xi1>, vector<1x128xf32>
    %24 = vector.extract_strided_slice %23 {offsets = [0, 0], sizes = [1, 32], strides = [1, 1]} : vector<1x128xf32> to vector<1x32xf32>
    %25 = vector.extract_strided_slice %23 {offsets = [0, 32], sizes = [1, 32], strides = [1, 1]} : vector<1x128xf32> to vector<1x32xf32>
    %26 = vector.extract_strided_slice %23 {offsets = [0, 64], sizes = [1, 32], strides = [1, 1]} : vector<1x128xf32> to vector<1x32xf32>
    %27 = vector.extract_strided_slice %23 {offsets = [0, 96], sizes = [1, 32], strides = [1, 1]} : vector<1x128xf32> to vector<1x32xf32>
    %28 = arith.mulf %24, %4 : vector<1x32xf32>
    %29 = arith.mulf %25, %27 : vector<1x32xf32>
    %30 = arith.addf %28, %29 : vector<1x32xf32>
    %31 = math.tanh %30 : vector<1x32xf32>
    %32 = arith.mulf %26, %31 : vector<1x32xf32>
    %c0_15 = arith.constant 0 : index
    %c0_16 = arith.constant 0 : index
    %33 = vector.load %arg8[%c0_15, %c0_16] : memref<1x32xf32, #tpu.memory_space<vmem>>, vector<1x32xf32>
    tpu.vector_store %arg8[%c0_15, %c0_16], %32 {strides = array<i32>} : memref<1x32xf32, #tpu.memory_space<vmem>>, vector<1x32xf32>,
    %c0_17 = arith.constant 0 : index
    %c0_18 = arith.constant 0 : index
    %34 = vector.load %arg9[%c0_17, %c0_18] : memref<1x32xf32, #tpu.memory_space<vmem>>, vector<1x32xf32>
    tpu.vector_store %arg9[%c0_17, %c0_18], %30 {strides = array<i32>} : memref<1x32xf32, #tpu.memory_space<vmem>>, vector<1x32xf32>,
    %c0_i32_19 = arith.constant 0 : i32
    %35 = arith.cmpi eq, %arg0, %c0_i32_19 : i32
    %36 = arith.extui %35 : i1 to i32
    %c0_i32_20 = arith.constant 0 : i32
    %37 = arith.cmpi ne, %36, %c0_i32_20 : i32
    scf.if %37 {
      %c0_21 = arith.constant 0 : index
      %c0_22 = arith.constant 0 : index
      %38 = vector.load %arg7[%c0_21, %c0_22] : memref<2x32xf32, #tpu.memory_space<vmem>>, vector<1x32xf32>
      tpu.vector_store %arg7[%c0_21, %c0_22], %32 {strides = array<i32>} : memref<2x32xf32, #tpu.memory_space<vmem>>, vector<1x32xf32>,
      %c1 = arith.constant 1 : index
      %c0_23 = arith.constant 0 : index
      %39 = vector.load %arg7[%c1, %c0_23] : memref<2x32xf32, #tpu.memory_space<vmem>>, vector<1x32xf32>
      tpu.vector_store %arg7[%c1, %c0_23], %30 {strides = array<i32>} : memref<2x32xf32, #tpu.memory_space<vmem>>, vector<1x32xf32>,
    } else {
    }
    return
  }
  func.func @transform_0(%arg0: i32) -> (i32, i32, i32) {
    %c0_i32 = arith.constant 0 : i32
    %c0_i32_0 = arith.constant 0 : i32
    %c0_i32_1 = arith.constant 0 : i32
    return %arg0, %c0_i32, %c0_i32_0 : i32, i32, i32
  }
  func.func @transform_1(%arg0: i32) -> (i32, i32) {
    %c0_i32 = arith.constant 0 : i32
    %c0_i32_0 = arith.constant 0 : i32
    %c0_i32_1 = arith.constant 0 : i32
    return %c0_i32, %c0_i32_0 : i32, i32
  }
  func.func @transform_2(%arg0: i32) -> (i32, i32) {
    %c0_i32 = arith.constant 0 : i32
    %c0_i32_0 = arith.constant 0 : i32
    %c0_i32_1 = arith.constant 0 : i32
    return %c0_i32, %c0_i32_0 : i32, i32
  }
  func.func @transform_3(%arg0: i32) -> (i32, i32) {
    %c0_i32 = arith.constant 0 : i32
    %c0_i32_0 = arith.constant 0 : i32
    %c0_i32_1 = arith.constant 0 : i32
    return %c0_i32, %c0_i32_0 : i32, i32
  }
  func.func @transform_4(%arg0: i32) -> (i32, i32) {
    %c0_i32 = arith.constant 0 : i32
    %c0_i32_0 = arith.constant 0 : i32
    %c0_i32_1 = arith.constant 0 : i32
    return %c0_i32, %c0_i32_0 : i32, i32
  }
  func.func @transform_5(%arg0: i32) -> (i32, i32) {
    %c0_i32 = arith.constant 0 : i32
    %c0_i32_0 = arith.constant 0 : i32
    %c0_i32_1 = arith.constant 0 : i32
    return %c0_i32, %c0_i32_0 : i32, i32
  }
  func.func @transform_6(%arg0: i32) -> (i32, i32) {
    %c0_i32 = arith.constant 0 : i32
    %c0_i32_0 = arith.constant 0 : i32
    %c0_i32_1 = arith.constant 0 : i32
    return %c0_i32, %c0_i32_0 : i32, i32
  }
}

</mosaic_0001>

<llo_original>
// kernel: _lstm_sequence_impl.1
$region0: #{_lstm_sequence_impl.1}
  #allocation0 [shape = 'u32[]', space=smem, size = 0x4, offset = 0x4, fixed_abs, tag = 'smem constant byte address 0x4 - core index']
  #allocation1 [shape = 'u32[72,128]{1,0:T(1,128)}', space=vmem, size = 0x9000, scoped, tag = 'internal scratch']
  #allocation2 [shape = 'f32[1,32]{1,0:T(1,128)}', space=vmem, size = 0x200, scoped, tag = 'scratch operand']
  #allocation3 [shape = 'f32[1,32]{1,0:T(1,128)}', space=vmem, size = 0x200, scoped, tag = 'scratch operand']
  %s0 = inlined_call_operand.vmem [shape: f32[1,1,16], index: 0, kind: input, shape index: {}]
  %s1 = inlined_call_operand.vmem [shape: f32[1,32], index: 1, kind: input, shape index: {}]
  %s2 = inlined_call_operand.vmem [shape: f32[1,32], index: 2, kind: input, shape index: {}]
  %s3 = inlined_call_operand.hbm [shape: f32[16,128], index: 3, kind: input, shape index: {}]
  %s4 = inlined_call_operand.hbm [shape: f32[32,128], index: 4, kind: input, shape index: {}]
  %s5 = inlined_call_operand.vmem [shape: f32[1,128], index: 5, kind: input, shape index: {}]
  %s6 = inlined_call_operand.vmem [shape: f32[2,32], index: 6, kind: output, shape index: {}]
  %s7 = sld [smem:[#allocation0]]
  $region50: #{_lstm_sequence_impl.1} parent=0
    _
  %s9 = ssub.s32 1, %s7
  %s10 = scalar_select 0, %s9, %s7
  $region1: #{_lstm_sequence_impl.1} parent=0
    #allocation4 [shape = 'u8[8192]{0}', space=vmem, size = 0x2000, scoped, tag = 'input window, operand 3, single buffered']
    #allocation5 [shape = 's32[1]{0}', space=sflag, size = 0x4, scoped, tag = 'scoped memory for _lstm_sequence_impl.1']
    #allocation6 [shape = 'u8[16384]{0}', space=vmem, size = 0x4000, scoped, tag = 'input window, operand 4, single buffered']
    #allocation7 [shape = 's32[1]{0}', space=sflag, size = 0x4, scoped, tag = 'scoped memory for _lstm_sequence_impl.1']
    %11 = vsyncpa [#allocation5], 0
    %12 = vsyncpa [#allocation7], 0
    // Predicated region
    $region2: #{_lstm_sequence_impl.1} parent=1 // pred_check
      _
    $region3: #{_lstm_sequence_impl.1} parent=1 // pred_check_branch
      %14 = sbr.rel (0) target = $region5
    $region4: #{_lstm_sequence_impl.1} parent=1 // pred_region
      _
    $region5: #{_lstm_sequence_impl.1} parent=1 // pred_fallthru
      _
    // Predicated region
    $region6: #{_lstm_sequence_impl.1} parent=1 // pred_check
      _
    $region7: #{_lstm_sequence_impl.1} parent=1 // pred_check_branch
      %16 = sbr.rel (0) target = $region9
    $region8: #{_lstm_sequence_impl.1} parent=1 // pred_region
      _
    $region9: #{_lstm_sequence_impl.1} parent=1 // pred_fallthru
      _
    // Predicated region
    $region10: #{_lstm_sequence_impl.1} parent=1 // pred_check
      _
    $region11: #{_lstm_sequence_impl.1} parent=1 // pred_check_branch
      %18 = sbr.rel (0) target = $region13
    $region12: #{_lstm_sequence_impl.1} parent=1 // pred_region
      _
    $region13: #{_lstm_sequence_impl.1} parent=1 // pred_fallthru
      _
    // Predicated region
    $region14: #{_lstm_sequence_impl.1} parent=1 // pred_check
      _
    $region15: #{_lstm_sequence_impl.1} parent=1 // pred_check_branch
      %20 = sbr.rel (0) target = $region17
    $region16: #{_lstm_sequence_impl.1} parent=1 // pred_region
      %22 = vsyncadd [#allocation5], 0
      %s23 = sshll.u32 %s3, 4
      %s24 = int_to_ptr.hbm [resolvable:$true] %s23
      %s25 = sshll.u32 [#allocation4], 4
      %s26 = int_to_ptr.vmem [resolvable:$true] %s25
      %31 = dma.hbm_to_vmem [thread:$0]  %s24, 256, %s26, [#allocation5], 128, 128, 8
    $region17: #{_lstm_sequence_impl.1} parent=1 // pred_fallthru
      _
    // Predicated region
    $region18: #{_lstm_sequence_impl.1} parent=1 // pred_check
      _
    $region19: #{_lstm_sequence_impl.1} parent=1 // pred_check_branch
      %33 = sbr.rel (0) target = $region21
    $region20: #{_lstm_sequence_impl.1} parent=1 // pred_region
      %35 = vsyncadd [#allocation7], 0
      %s36 = sshll.u32 %s4, 4
      %s37 = int_to_ptr.hbm [resolvable:$true] %s36
      %s38 = sshll.u32 [#allocation6], 4
      %s39 = int_to_ptr.vmem [resolvable:$true] %s38
      %44 = dma.hbm_to_vmem [thread:$0]  %s37, 512, %s39, [#allocation7], 128, 128, 8
    $region21: #{_lstm_sequence_impl.1} parent=1 // pred_fallthru
      _
    // Predicated region
    $region22: #{_lstm_sequence_impl.1} parent=1 // pred_check
      _
    $region23: #{_lstm_sequence_impl.1} parent=1 // pred_check_branch
      %46 = sbr.rel (0) target = $region25
    $region24: #{_lstm_sequence_impl.1} parent=1 // pred_region
      _
    $region25: #{_lstm_sequence_impl.1} parent=1 // pred_fallthru
      _
    // Predicated region
    $region26: #{_lstm_sequence_impl.1} parent=1 // pred_check
      _
    $region27: #{_lstm_sequence_impl.1} parent=1 // pred_check_branch
      %48 = sbr.rel (0) target = $region29
    $region28: #{_lstm_sequence_impl.1} parent=1 // pred_region
      %50 = dma.done [#allocation5], 256
    $region29: #{_lstm_sequence_impl.1} parent=1 // pred_fallthru
      _
    // Predicated region
    $region30: #{_lstm_sequence_impl.1} parent=1 // pred_check
      _
    $region31: #{_lstm_sequence_impl.1} parent=1 // pred_check_branch
      %52 = sbr.rel (0) target = $region33
    $region32: #{_lstm_sequence_impl.1} parent=1 // pred_region
      %54 = dma.done [#allocation7], 512
    $region33: #{_lstm_sequence_impl.1} parent=1 // pred_fallthru
      _
    %p55 = scmp.eq.s32.totalorder 0, 0
    // Predicated region
    $region34: #{_lstm_sequence_impl.1} parent=1 // pred_check
      %p56 = pneg %p55
    $region35: #{_lstm_sequence_impl.1} parent=1 // pred_check_branch
      %58 = sbr.rel (%p56) target = $region37
    $region36: #{_lstm_sequence_impl.1} parent=1 // pred_region
      %v59 = vld [vmem:[%s1] sm:$0x1]
      %vm60 = vcmask 253952
      %61 = vst.msk [vmem:[#allocation2] sm:$0x1] %vm60, %v59
      %v62 = vld [vmem:[%s2] sm:$0x1]
      %63 = vst.msk [vmem:[#allocation3] sm:$0x1] %vm60, %v62
    $region37: #{_lstm_sequence_impl.1} parent=1 // pred_fallthru
      _
    %v64 = vld [vmem:[#allocation2] sm:$0x1]
    %v65 = vld [vmem:[#allocation3] sm:$0x1]
    %v66 = vld [vmem:[%s0] sm:$0x1]
    %v67 = vld [vmem:[#allocation4] sm:$0xff]
    %v68 = vld [vmem:[#allocation4 + $0x8] sm:$0xff]
    %v69 = vld [vmem:[#allocation6] sm:$0xff]
    %v70 = vld [vmem:[#allocation6 + $0x8] sm:$0xff]
    %v71 = vld [vmem:[#allocation6 + $0x10] sm:$0xff]
    %v72 = vld [vmem:[#allocation6 + $0x18] sm:$0xff]
    %vm73 = vcmask 261120
    %v75 = vsel %vm73, %v64, 0
    %77 = vmatpush.msra.mxu0 0.0
    %78 = vmatpush.msra.mxu0 0.0
    %79 = vmatpush.msra.mxu0 0.0
    %80 = vmatpush.msra.mxu0 0.0
    %81 = vmatpush.msra.mxu0 0.0
    %82 = vmatpush.msra.mxu0 0.0
    %83 = vmatpush.msra.mxu0 0.0
    %84 = vmatpush.msra.mxu0 0.0
    %85 = vmatpush.msra.mxu0 0.0
    %86 = vmatpush.msra.mxu0 0.0
    %87 = vmatpush.msra.mxu0 0.0
    %88 = vmatpush.msra.mxu0 0.0
    %89 = vmatpush.msra.mxu0 %v72
    %90 = vmatpush.msra.mxu0 %v71
    %91 = vmatpush.msra.mxu0 %v70
    %92 = vmatpush.msra.mxu0 %v69
    %93 = vmatmul.f32.gmra.mxu0 %v75
    %v94 = vpop.f32.mrf.mxu0
    %v95 = vadd.f32 0.0, %v94
    %96 = vdwg.mxu0
    %vm97 = vcmask 130048
    %v99 = vsel %vm97, %v66, 0
    %101 = vmatpush.msra.mxu0 0.0
    %102 = vmatpush.msra.mxu0 0.0
    %103 = vmatpush.msra.mxu0 0.0
    %104 = vmatpush.msra.mxu0 0.0
    %105 = vmatpush.msra.mxu0 0.0
    %106 = vmatpush.msra.mxu0 0.0
    %107 = vmatpush.msra.mxu0 0.0
    %108 = vmatpush.msra.mxu0 0.0
    %109 = vmatpush.msra.mxu0 0.0
    %110 = vmatpush.msra.mxu0 0.0
    %111 = vmatpush.msra.mxu0 0.0
    %112 = vmatpush.msra.mxu0 0.0
    %113 = vmatpush.msra.mxu0 0.0
    %114 = vmatpush.msra.mxu0 0.0
    %115 = vmatpush.msra.mxu0 %v68
    %116 = vmatpush.msra.mxu0 %v67
    %117 = vmatmul.f32.gmra.mxu0 %v99
    %v118 = vpop.f32.mrf.mxu0
    %v119 = vadd.f32 %v95, %v118
    %120 = vdwg.mxu0
    %v121 = vld [vmem:[%s5] sm:$0x1]
    %v122 = vadd.f32 %v119, %v121
    %v123 = vlaneseq
    %v124 = vand.u32 %v123, 127
    %vm125 = vcmp.lt.s32.totalorder %v124, 96
    %v126 = vxor.u32 %v122, 2147483648
    %v127 = vmul.f32 %v126, 1.442695
    %v128 = vpow.pop %v127
    %v129 = vadd.f32 %v128, 1.0
    %v130 = vrcp.pop %v129
    %v131 = vmul.f32 %v129, %v130
    %v132 = vsub.f32 1.0, %v131
    %v133 = vmul.f32 %v130, %v132
    %v134 = vadd.f32 %v130, %v133
    %vm135 = vweird.f32 %v129
    %vm136 = vweird.f32 %v130
    %vm137 = vmor %vm135, %vm136
    %v138 = vsel %vm137, %v130, %v134
    %v139 = vand.u32 2147483647, %v129
    %vm140 = vcmp.eq.f32.partialorder %v139, 8.507059e+37
    %v141 = vand.u32 %v129, 2147483648
    %v142 = vor.u32 1.1754944e-38, %v141
    %v143 = vsel %vm140, %v142, %v138
    %v144 = vmul.f32 1.0, %v143
    %v145 = vtanh.pop %v122
    %v146 = vsel %vm125, %v144, %v145
    %v147 = vmul.f32 %v146, %v65
    %149 = vrot.lane.b32.xlu0 %v146, 64
    %v150 = vpop.permute.xlu0 %149
    %v152 = vmul.f32 %v146, %v150
    %154 = vrot.lane.b32.xlu0 %v152, 96
    %v155 = vpop.permute.xlu0 %154
    %v157 = vadd.f32 %v147, %v155
    %v158 = vtanh.pop %v157
    %160 = vrot.lane.b32.xlu0 %v158, 64
    %v161 = vpop.permute.xlu0 %160
    %v163 = vmul.f32 %v146, %v161
    %165 = vrot.lane.b32.xlu0 %v163, 64
    %v166 = vpop.permute.xlu0 %165
    %vm168 = vcmask 253952
    %169 = vst.msk [vmem:[#allocation2] sm:$0x1] %vm168, %v166
    %170 = vst.msk [vmem:[#allocation3] sm:$0x1] %vm168, %v157
    // Predicated region
    $region38: #{_lstm_sequence_impl.1} parent=1 // pred_check
      %p171 = pneg %p55
    $region39: #{_lstm_sequence_impl.1} parent=1 // pred_check_branch
      %173 = sbr.rel (%p171) target = $region41
    $region40: #{_lstm_sequence_impl.1} parent=1 // pred_region
      %174 = vst.msk [vmem:[%s6] sm:$0x1] %vm168, %v166
      %175 = vst.msk [vmem:[%s6 + $0x1] sm:$0x1] %vm168, %v157
    $region41: #{_lstm_sequence_impl.1} parent=1 // pred_fallthru
      _
    // Predicated region
    $region42: #{_lstm_sequence_impl.1} parent=1 // pred_check
      _
    $region43: #{_lstm_sequence_impl.1} parent=1 // pred_check_branch
      %177 = sbr.rel (0) target = $region45
    $region44: #{_lstm_sequence_impl.1} parent=1 // pred_region
      _
    $region45: #{_lstm_sequence_impl.1} parent=1 // pred_fallthru
      _
    // Predicated region
    $region46: #{_lstm_sequence_impl.1} parent=1 // pred_check
      _
    $region47: #{_lstm_sequence_impl.1} parent=1 // pred_check_branch
      %179 = sbr.rel (0) target = $region49
    $region48: #{_lstm_sequence_impl.1} parent=1 // pred_region
      _
    $region49: #{_lstm_sequence_impl.1} parent=1 // pred_fallthru
      _
    %180 = vsyncpa [#allocation5], 1
    %181 = vsyncpa [#allocation7], 1

</llo_original>
